<compile_context>
chip_gen: v7x
topology: tpu7x:2x2x1
jax: 0.10.0
libtpu: 0.0.40
codegen_flags: <defaults>
</compile_context>

<pallas_src>
import functools

import jax
import jax.numpy as jnp
from jax.experimental import pallas as pl
from jax.experimental.pallas import tpu as pltpu


def critic_kernel(x_ref, w1_ref, b1_ref, w2_ref, b2_ref, w3_ref, b3_ref, o_ref,
                  *, act_dtype):
    # MXU operands in bf16 (weights already pre-cast), f32 accumulation.
    x = x_ref[...].astype(jnp.bfloat16)

    # Layer 1: Linear (MXU) + bias (f32, VPU) + Tanh (EUP, act_dtype).
    s1 = jnp.dot(x, w1_ref[...], preferred_element_type=jnp.float32) + b1_ref[...]
    h1 = jnp.tanh(s1.astype(act_dtype)).astype(jnp.bfloat16)

    # Layer 2: Linear + Tanh.
    s2 = jnp.dot(h1, w2_ref[...], preferred_element_type=jnp.float32) + b2_ref[...]
    h2 = jnp.tanh(s2.astype(act_dtype))

    # Layer 3: out_features == 1 -> VPU multiply + XLU lane reduction instead of
    # an N=1 MXU pass. w3_ref is a (1, neu_size) f32 row, b3_ref is a (1,) SMEM scalar.
    out = jnp.sum(h2.astype(jnp.float32) * w3_ref[...], axis=-1, keepdims=True) + b3_ref[0]
    o_ref[...] = out.astype(o_ref.dtype)


def _round_up(n, m):
    return ((n + m - 1) // m) * m


def _pick_tile_b(B, tile_b, cap=32768, split_threshold=8192):
    """Batch tile: multiple of 8 sublanes, capped; big enough to amortize
    grid-step overhead, and >=2 grid steps for large single-tile batches so the
    'parallel' batch axis can shard across both v7x TensorCores."""
    b8 = _round_up(max(int(B), 1), 8)
    tb = max(8, (min(int(tile_b), cap) // 8) * 8)
    if b8 <= tb:
        tb = _round_up(b8 // 2, 8) if b8 >= split_threshold else b8
    return tb


def _tanh_dtype():
    """bf16 tanh on v6e/v7x (bf16 EUP); f32 elsewhere (v5e has no bf16 EUP/VPU)."""
    try:
        kind = jax.devices()[0].device_kind.lower()
    except Exception:
        return jnp.float32
    if ("v6" in kind) or ("v7" in kind) or ("tpu7" in kind):
        return jnp.bfloat16
    return jnp.float32


def critic_forward(x, w1, b1, w2, b2, w3, b3, *, tile_b=16384):
    """x: (B, input_size) -> (B, 1). Weights stored as (in, out); w3 is (neu, 1)."""
    B, input_size = x.shape
    neu_size = w1.shape[1]

    # Resident parameters: pre-cast MXU operands to bf16 once (outside the grid).
    w1_bf = w1.astype(jnp.bfloat16)
    w2_bf = w2.astype(jnp.bfloat16)
    w3_row = w3.reshape(1, neu_size).astype(jnp.float32)   # VPU/XLU head stays f32
    b1_row = b1.reshape(1, neu_size).astype(jnp.float32)
    b2_row = b2.reshape(1, neu_size).astype(jnp.float32)
    b3_s = b3.reshape(1).astype(jnp.float32)                # scalar bias -> SMEM

    tb = _pick_tile_b(B, tile_b)
    grid = (pl.cdiv(B, tb),)        # ragged last block handled by Pallas (no jnp.pad)
    act_dtype = _tanh_dtype()

    const2 = lambda i: (0, 0)       # params stay resident (same block every step)

    out = pl.pallas_call(
        functools.partial(critic_kernel, act_dtype=act_dtype),
        out_shape=jax.ShapeDtypeStruct((B, 1), x.dtype),
        grid_spec=pltpu.PrefetchScalarGridSpec(
            num_scalar_prefetch=0,
            grid=grid,
            in_specs=[
                pl.BlockSpec((tb, input_size), lambda i: (i, 0)),   # x: batch-tiled
                pl.BlockSpec(w1_bf.shape, const2),
                pl.BlockSpec(b1_row.shape, const2),
                pl.BlockSpec(w2_bf.shape, const2),
                pl.BlockSpec(b2_row.shape, const2),
                pl.BlockSpec(w3_row.shape, const2),
                pl.BlockSpec(memory_space=pltpu.MemorySpace.SMEM),  # b3 scalar
            ],
            out_specs=pl.BlockSpec((tb, 1), lambda i: (i, 0)),
        ),
        compiler_params=pltpu.CompilerParams(
            dimension_semantics=("parallel",),        # megacore sharding on v7x
            vmem_limit_bytes=48 * 1024 * 1024,        # > v5e 16 MiB scoped default
        ),
    )(x, w1_bf, b1_row, w2_bf, b2_row, w3_row, b3_s)
    return out


def init_critic_params(key, input_size, neu_size, dtype=jnp.float32):
    """Deterministic parameter init (uniform, torch.nn.Linear-style bounds)."""
    ks = jax.random.split(key, 6)

    def linear_init(kw, kb, fan_in, fan_out):
        bound = 1.0 / jnp.sqrt(jnp.float32(fan_in))
        w = jax.random.uniform(kw, (fan_in, fan_out), dtype, -bound, bound)
        b = jax.random.uniform(kb, (1, fan_out), dtype, -bound, bound)
        return w, b

    w1, b1 = linear_init(ks[0], ks[1], input_size, neu_size)
    w2, b2 = linear_init(ks[2], ks[3], neu_size, neu_size)
    w3, b3 = linear_init(ks[4], ks[5], neu_size, 1)
    return w1, b1, w2, b2, w3, b3


def _reference(x, w1, b1, w2, b2, w3, b3):
    h = jnp.tanh(x @ w1 + b1)
    h = jnp.tanh(h @ w2 + b2)
    return h @ w3 + b3


if __name__ == "__main__":
    input_size = 32
    neu_size = 32

    key = jax.random.PRNGKey(0)
    kx, kp, kx2, kx3 = jax.random.split(key, 4)
    params = init_critic_params(kp, input_size, neu_size)

    # Small-shape run (single tile).
    batch = 8
    x = jax.random.normal(kx, (batch, input_size), dtype=jnp.float32)
    out = jax.block_until_ready(critic_forward(x, *params))
    ref = _reference(x, *params)
    assert out.shape == (batch, 1)
    # bf16 MXU operands (and bf16 tanh on v6e/v7x) -> ~1e-2-level diffs vs f32 ref.
    assert jnp.allclose(out, ref, atol=3e-2, rtol=3e-2)

    # Multi-tile run exercising the batch grid + ragged (non-divisible) last block.
    batch2 = 2050
    x2 = jax.random.normal(kx2, (batch2, input_size), dtype=jnp.float32)
    out2 = jax.block_until_ready(critic_forward(x2, *params, tile_b=512))
    ref2 = _reference(x2, *params)
    assert out2.shape == (batch2, 1)
    assert jnp.allclose(out2, ref2, atol=3e-2, rtol=3e-2)

    # Large-batch run on the default (large) tile path: 2 grid steps, ragged tail.
    batch3 = 20000
    x3 = jax.random.normal(kx3, (batch3, input_size), dtype=jnp.float32)
    out3 = jax.block_until_ready(critic_forward(x3, *params))
    ref3 = _reference(x3, *params)
    assert out3.shape == (batch3, 1)
    assert bool(jnp.all(jnp.isfinite(out3)))
    assert jnp.allclose(out3, ref3, atol=5e-2, rtol=5e-2)

    print("KERNEL_OK")
</pallas_src>

<mosaic_0001>
module attributes {stable_mosaic.version = 11 : i64} {
  func.func @critic_kernel(%arg0: i32, %arg1: memref<8x32xf32, #tpu.memory_space<vmem>>, %arg2: memref<32x32xbf16, #tpu.memory_space<vmem>>, %arg3: memref<1x32xf32, #tpu.memory_space<vmem>>, %arg4: memref<32x32xbf16, #tpu.memory_space<vmem>>, %arg5: memref<1x32xf32, #tpu.memory_space<vmem>>, %arg6: memref<1x32xf32, #tpu.memory_space<vmem>>, %arg7: memref<1xf32, #tpu.memory_space<smem>>, %arg8: memref<8x1xf32, #tpu.memory_space<vmem>>) attributes {dimension_semantics = [#tpu.dimension_semantics<parallel>], iteration_bounds = array<i64: 1>, scalar_prefetch = 0 : i64, scratch_operands = 0 : i64, tpu.core_type = #tpu.core_type<tc>, window_params = [{transform_indices = @transform_0, window_bounds = array<i64: 8, 32>}, {pipeline_mode = #tpu.pipeline_mode<synchronous>, transform_indices = @transform_1, window_bounds = array<i64: 32, 32>}, {pipeline_mode = #tpu.pipeline_mode<synchronous>, transform_indices = @transform_2, window_bounds = array<i64: 1, 32>}, {pipeline_mode = #tpu.pipeline_mode<synchronous>, transform_indices = @transform_3, window_bounds = array<i64: 32, 32>}, {pipeline_mode = #tpu.pipeline_mode<synchronous>, transform_indices = @transform_4, window_bounds = array<i64: 1, 32>}, {pipeline_mode = #tpu.pipeline_mode<synchronous>, transform_indices = @transform_5, window_bounds = array<i64: 1, 32>}, {transform_indices = @transform_6, window_bounds = array<i64: 1>}, {transform_indices = @transform_7, window_bounds = array<i64: 8, 1>}]} {
    %c0 = arith.constant 0 : index
    %c0_0 = arith.constant 0 : index
    %0 = vector.load %arg1[%c0, %c0_0] : memref<8x32xf32, #tpu.memory_space<vmem>>, vector<8x32xf32>
    %1 = arith.truncf %0 : vector<8x32xf32> to vector<8x32xbf16>
    %c0_1 = arith.constant 0 : index
    %c0_2 = arith.constant 0 : index
    %2 = vector.load %arg2[%c0_1, %c0_2] : memref<32x32xbf16, #tpu.memory_space<vmem>>, vector<32x32xbf16>
    %cst = arith.constant dense<0.000000e+00> : vector<8x32xf32>
    %3 = tpu.matmul %1, %2, %cst {dimension_numbers = #tpu.dot_dimension_numbers<[1], [0], [0], [1], [0, 0, 1, 1], [], []>} : vector<8x32xbf16>, vector<32x32xbf16>, vector<8x32xf32> -> vector<8x32xf32>
    %c0_3 = arith.constant 0 : index
    %c0_4 = arith.constant 0 : index
    %4 = vector.load %arg3[%c0_3, %c0_4] : memref<1x32xf32, #tpu.memory_space<vmem>>, vector<1x32xf32>
    %5 = vector.broadcast %4 : vector<1x32xf32> to vector<8x32xf32>
    %6 = arith.addf %3, %5 : vector<8x32xf32>
    %7 = math.tanh %6 : vector<8x32xf32>
    %8 = arith.truncf %7 : vector<8x32xf32> to vector<8x32xbf16>
    %c0_5 = arith.constant 0 : index
    %c0_6 = arith.constant 0 : index
    %9 = vector.load %arg4[%c0_5, %c0_6] : memref<32x32xbf16, #tpu.memory_space<vmem>>, vector<32x32xbf16>
    %cst_7 = arith.constant dense<0.000000e+00> : vector<8x32xf32>
    %10 = tpu.matmul %8, %9, %cst_7 {dimension_numbers = #tpu.dot_dimension_numbers<[1], [0], [0], [1], [0, 0, 1, 1], [], []>} : vector<8x32xbf16>, vector<32x32xbf16>, vector<8x32xf32> -> vector<8x32xf32>
    %c0_8 = arith.constant 0 : index
    %c0_9 = arith.constant 0 : index
    %11 = vector.load %arg5[%c0_8, %c0_9] : memref<1x32xf32, #tpu.memory_space<vmem>>, vector<1x32xf32>
    %12 = vector.broadcast %11 : vector<1x32xf32> to vector<8x32xf32>
    %13 = arith.addf %10, %12 : vector<8x32xf32>
    %14 = math.tanh %13 : vector<8x32xf32>
    %c0_10 = arith.constant 0 : index
    %c0_11 = arith.constant 0 : index
    %15 = vector.load %arg6[%c0_10, %c0_11] : memref<1x32xf32, #tpu.memory_space<vmem>>, vector<1x32xf32>
    %16 = vector.broadcast %15 : vector<1x32xf32> to vector<8x32xf32>
    %17 = arith.mulf %14, %16 : vector<8x32xf32>
    %cst_12 = arith.constant dense<0.000000e+00> : vector<8xf32>
    %18 = vector.multi_reduction <add>, %17, %cst_12 [1] : vector<8x32xf32> to vector<8xf32>
    %19 = vector.shape_cast %18 : vector<8xf32> to vector<8x1xf32>
    %c0_13 = arith.constant 0 : index
    %20 = memref.load %arg7[%c0_13] : memref<1xf32, #tpu.memory_space<smem>>
    %21 = vector.broadcast %20 : f32 to vector<8x1xf32>
    %22 = arith.addf %19, %21 : vector<8x1xf32>
    %c0_14 = arith.constant 0 : index
    %c0_15 = arith.constant 0 : index
    %23 = vector.load %arg8[%c0_14, %c0_15] : memref<8x1xf32, #tpu.memory_space<vmem>>, vector<8x1xf32>
    tpu.vector_store %arg8[%c0_14, %c0_15], %22 {strides = array<i32>} : memref<8x1xf32, #tpu.memory_space<vmem>>, vector<8x1xf32>,
    return
  }
  func.func @transform_0(%arg0: i32) -> (i32, i32) {
    %c0_i32 = arith.constant 0 : i32
    %c0_i32_0 = arith.constant 0 : i32
    return %arg0, %c0_i32 : i32, i32
  }
  func.func @transform_1(%arg0: i32) -> (i32, i32) {
    %c0_i32 = arith.constant 0 : i32
    %c0_i32_0 = arith.constant 0 : i32
    %c0_i32_1 = arith.constant 0 : i32
    return %c0_i32, %c0_i32_0 : i32, i32
  }
  func.func @transform_2(%arg0: i32) -> (i32, i32) {
    %c0_i32 = arith.constant 0 : i32
    %c0_i32_0 = arith.constant 0 : i32
    %c0_i32_1 = arith.constant 0 : i32
    return %c0_i32, %c0_i32_0 : i32, i32
  }
  func.func @transform_3(%arg0: i32) -> (i32, i32) {
    %c0_i32 = arith.constant 0 : i32
    %c0_i32_0 = arith.constant 0 : i32
    %c0_i32_1 = arith.constant 0 : i32
    return %c0_i32, %c0_i32_0 : i32, i32
  }
  func.func @transform_4(%arg0: i32) -> (i32, i32) {
    %c0_i32 = arith.constant 0 : i32
    %c0_i32_0 = arith.constant 0 : i32
    %c0_i32_1 = arith.constant 0 : i32
    return %c0_i32, %c0_i32_0 : i32, i32
  }
  func.func @transform_5(%arg0: i32) -> (i32, i32) {
    %c0_i32 = arith.constant 0 : i32
    %c0_i32_0 = arith.constant 0 : i32
    %c0_i32_1 = arith.constant 0 : i32
    return %c0_i32, %c0_i32_0 : i32, i32
  }
  func.func @transform_6(%arg0: i32) -> i32 {
    %c0_i32 = arith.constant 0 : i32
    %c0_i32_0 = arith.constant 0 : i32
    return %c0_i32 : i32
  }
  func.func @transform_7(%arg0: i32) -> (i32, i32) {
    %c0_i32 = arith.constant 0 : i32
    %c0_i32_0 = arith.constant 0 : i32
    return %arg0, %c0_i32 : i32, i32
  }
}

</mosaic_0001>

<llo_original>
// kernel: tpu_custom_call.1
$region0: #{tpu_custom_call.1}
  #allocation0 [shape = 'u32[]', space=smem, size = 0x4, offset = 0x4, fixed_abs, tag = 'smem constant byte address 0x4 - core index']
  #allocation1 [shape = 'u32[144,128]{1,0:T(1,128)}', space=vmem, size = 0x12000, scoped, tag = 'internal scratch']
  #allocation2 [shape = 'f32[1]{0:T(128)S(6)}', space=smem, size = 0x200, scoped, tag = 'scoped memory for tpu_custom_call.1']
  %s0 = inlined_call_operand.hbm [shape: f32[8,32], index: 0, kind: input, shape index: {}]
  %s1 = inlined_call_operand.hbm [shape: bf16[32,32], index: 1, kind: input, shape index: {}]
  %s2 = inlined_call_operand.vmem [shape: f32[1,32], index: 2, kind: input, shape index: {}]
  %s3 = inlined_call_operand.hbm [shape: bf16[32,32], index: 3, kind: input, shape index: {}]
  %s4 = inlined_call_operand.vmem [shape: f32[1,32], index: 4, kind: input, shape index: {}]
  %s5 = inlined_call_operand.vmem [shape: f32[1,32], index: 5, kind: input, shape index: {}]
  %s6 = inlined_call_operand.<no memory space> [shape: f32[1], index: 6, kind: input, shape index: {}]
  %s7 = inlined_call_operand.vmem [shape: f32[8,1], index: 7, kind: output, shape index: {}]
  %s8 = sld [smem:[#allocation0]]
  $region50: #{tpu_custom_call.1} parent=0
    _
  %s10 = ssub.s32 1, %s8
  %s11 = scalar_select 0, %s10, %s8
  %12 = sst [smem:[#allocation2]] %s6
  $region1: #{tpu_custom_call.1} parent=0
    #allocation3 [shape = 'u8[4096]{0}', space=vmem, size = 0x1000, scoped, tag = 'input window, operand 0, single buffered']
    #allocation4 [shape = 's32[1]{0}', space=sflag, size = 0x4, scoped, tag = 'scoped memory for tpu_custom_call.1']
    #allocation5 [shape = 'u8[8192]{0}', space=vmem, size = 0x2000, scoped, tag = 'input window, operand 1, single buffered']
    #allocation6 [shape = 's32[1]{0}', space=sflag, size = 0x4, scoped, tag = 'scoped memory for tpu_custom_call.1']
    #allocation7 [shape = 'u8[8192]{0}', space=vmem, size = 0x2000, scoped, tag = 'input window, operand 3, single buffered']
    %13 = vsyncpa [#allocation4], 0
    %14 = vsyncpa [#allocation6], 0
    // Predicated region
    $region2: #{tpu_custom_call.1} parent=1 // pred_check
      _
    $region3: #{tpu_custom_call.1} parent=1 // pred_check_branch
      %16 = sbr.rel (0) target = $region5
    $region4: #{tpu_custom_call.1} parent=1 // pred_region
      %s18 = ssub.s32 128, 128
      %19 = vsyncadd [#allocation4], %s18
      %s21 = sshll.u32 [#allocation3], 4
      %s22 = int_to_ptr.vmem [resolvable:$true] %s21
      %24 = dma.hbm_to_vmem [thread:$0]  %s0, 128, %s22, [#allocation4]
    $region5: #{tpu_custom_call.1} parent=1 // pred_fallthru
      _
    // Predicated region
    $region6: #{tpu_custom_call.1} parent=1 // pred_check
      _
    $region7: #{tpu_custom_call.1} parent=1 // pred_check_branch
      %26 = sbr.rel (0) target = $region9
    $region8: #{tpu_custom_call.1} parent=1 // pred_region
      %s28 = ssub.s32 256, 256
      %29 = vsyncadd [#allocation6], %s28
      %s30 = sshll.u32 [#allocation5], 4
      %s31 = int_to_ptr.vmem [resolvable:$true] %s30
      %36 = dma.hbm_to_vmem [thread:$0]  %s1, 256, %s31, [#allocation6], 64, 64, 4
    $region9: #{tpu_custom_call.1} parent=1 // pred_fallthru
      _
    // Predicated region
    $region10: #{tpu_custom_call.1} parent=1 // pred_check
      _
    $region11: #{tpu_custom_call.1} parent=1 // pred_check_branch
      %38 = sbr.rel (0) target = $region13
    $region12: #{tpu_custom_call.1} parent=1 // pred_region
      _
    $region13: #{tpu_custom_call.1} parent=1 // pred_fallthru
      _
    // Predicated region
    $region14: #{tpu_custom_call.1} parent=1 // pred_check
      _
    $region15: #{tpu_custom_call.1} parent=1 // pred_check_branch
      %40 = sbr.rel (0) target = $region17
    $region16: #{tpu_custom_call.1} parent=1 // pred_region
      %s42 = ssub.s32 256, 256
      %43 = vsyncadd [#allocation6], %s42
      %s44 = sshll.u32 [#allocation7], 4
      %s45 = int_to_ptr.vmem [resolvable:$true] %s44
      %50 = dma.hbm_to_vmem [thread:$0]  %s3, 256, %s45, [#allocation6], 64, 64, 4
    $region17: #{tpu_custom_call.1} parent=1 // pred_fallthru
      _
    // Predicated region
    $region18: #{tpu_custom_call.1} parent=1 // pred_check
      _
    $region19: #{tpu_custom_call.1} parent=1 // pred_check_branch
      %52 = sbr.rel (0) target = $region21
    $region20: #{tpu_custom_call.1} parent=1 // pred_region
      _
    $region21: #{tpu_custom_call.1} parent=1 // pred_fallthru
      _
    // Predicated region
    $region22: #{tpu_custom_call.1} parent=1 // pred_check
      _
    $region23: #{tpu_custom_call.1} parent=1 // pred_check_branch
      %54 = sbr.rel (0) target = $region25
    $region24: #{tpu_custom_call.1} parent=1 // pred_region
      _
    $region25: #{tpu_custom_call.1} parent=1 // pred_fallthru
      _
    // Predicated region
    $region26: #{tpu_custom_call.1} parent=1 // pred_check
      _
    $region27: #{tpu_custom_call.1} parent=1 // pred_check_branch
      %56 = sbr.rel (0) target = $region29
    $region28: #{tpu_custom_call.1} parent=1 // pred_region
      _
    $region29: #{tpu_custom_call.1} parent=1 // pred_fallthru
      _
    // Predicated region
    $region30: #{tpu_custom_call.1} parent=1 // pred_check
      _
    $region31: #{tpu_custom_call.1} parent=1 // pred_check_branch
      %58 = sbr.rel (0) target = $region33
    $region32: #{tpu_custom_call.1} parent=1 // pred_region
      %59 = dma.done [#allocation4], 128
    $region33: #{tpu_custom_call.1} parent=1 // pred_fallthru
      _
    // Predicated region
    $region34: #{tpu_custom_call.1} parent=1 // pred_check
      _
    $region35: #{tpu_custom_call.1} parent=1 // pred_check_branch
      %61 = sbr.rel (0) target = $region37
    $region36: #{tpu_custom_call.1} parent=1 // pred_region
      %62 = dma.done [#allocation6], 256
    $region37: #{tpu_custom_call.1} parent=1 // pred_fallthru
      _
    // Predicated region
    $region38: #{tpu_custom_call.1} parent=1 // pred_check
      _
    $region39: #{tpu_custom_call.1} parent=1 // pred_check_branch
      %64 = sbr.rel (0) target = $region41
    $region40: #{tpu_custom_call.1} parent=1 // pred_region
      %65 = dma.done [#allocation6], 256
    $region41: #{tpu_custom_call.1} parent=1 // pred_fallthru
      _
    %v67 = vld [vmem:[#allocation3] sm:$0xff]
    %v68 = vpack.c.bf16 %v67, %v67
    %v69 = vld [vmem:[#allocation5] sm:$0xf]
    %v70 = vld [vmem:[#allocation5 + $0x4] sm:$0xf]
    %v71 = vld [vmem:[#allocation5 + $0x8] sm:$0xf]
    %v72 = vld [vmem:[#allocation5 + $0xc] sm:$0xf]
    %v73 = vld [vmem:[%s2] sm:$0x1]
    %v75 = vlaneseq
    %v76 = vshrl.u32 %v75, 7
    %v77 = vsub.s32 0, %v76
    %v78 = vrot.slane %v73, %v77
    %v84 = vunpack.c.l.b16 %v69
    %v85 = vunpack.c.l.b16 %v70
    %v86 = vunpack.c.l.b16 %v71
    %v87 = vunpack.c.l.b16 %v72
    %v88 = vpack.c.b16 %v85, %v84
    %v89 = vpack.c.b16 %v87, %v86
    %vm92 = vcmask 261120
    %v94 = vsel %vm92, %v68, 0
    %96 = vmatprep.subr.bf16.mxu0 0
    %97 = vmatpush1.bf16.msra.mxu0 %v88
    %98 = vmatprep.subr.bf16.mxu0 0
    %99 = vmatpush1.bf16.msra.mxu0 %v89
    %100 = vmatprep.subr.bf16.mxu0 0
    %101 = vmatpush1.bf16.msra.mxu0 0
    %102 = vmatprep.subr.bf16.mxu0 0
    %103 = vmatpush1.bf16.msra.mxu0 0
    %104 = vmatprep.subr.bf16.mxu0 0
    %105 = vmatpush1.bf16.msra.mxu0 0
    %106 = vmatprep.subr.bf16.mxu0 0
    %107 = vmatpush1.bf16.msra.mxu0 0
    %108 = vmatprep.subr.bf16.mxu0 0
    %109 = vmatpush1.bf16.msra.mxu0 0
    %110 = vmatprep.subr.bf16.mxu0 0
    %111 = vmatpush1.bf16.msra.mxu0 0
    %112 = vmatprep.subr.bf16.mxu0 0
    %113 = vmatpush1.bf16.msra.mxu0 0
    %114 = vmatprep.subr.bf16.mxu0 0
    %115 = vmatpush1.bf16.msra.mxu0 0
    %116 = vmatprep.subr.bf16.mxu0 0
    %117 = vmatpush1.bf16.msra.mxu0 0
    %118 = vmatprep.subr.bf16.mxu0 0
    %119 = vmatpush1.bf16.msra.mxu0 0
    %120 = vmatprep.subr.bf16.mxu0 0
    %121 = vmatpush1.bf16.msra.mxu0 0
    %122 = vmatprep.subr.bf16.mxu0 0
    %123 = vmatpush1.bf16.msra.mxu0 0
    %124 = vmatprep.subr.bf16.mxu0 0
    %125 = vmatpush1.bf16.msra.mxu0 0
    %126 = vmatprep.subr.bf16.mxu0 0
    %127 = vmatpush1.bf16.msra.mxu0 0
    %128 = vmatprep.mubr.bf16.mxu0 0
    %129 = vmatmul.mubr.bf16.gmra.mrb[0].mxu0 %v94
    %v130 = vpop.f32.mrb[0].mxu0
    %v131 = vadd.f32 %v78, %v130
    %v132 = vpop.f32.mrb[0].mxu0
    %v133 = vpop.f32.mrb[0].mxu0
    %v134 = vpop.f32.mrb[0].mxu0
    %135 = vdwg.mxu0
    %v136 = vtanh.pop %v131
    %v137 = vpack.c.bf16 %v136, %v136
    %v138 = vld [vmem:[#allocation7] sm:$0xf]
    %v139 = vld [vmem:[#allocation7 + $0x4] sm:$0xf]
    %v140 = vld [vmem:[#allocation7 + $0x8] sm:$0xf]
    %v141 = vld [vmem:[#allocation7 + $0xc] sm:$0xf]
    %v142 = vld [vmem:[%s4] sm:$0x1]
    %v144 = vlaneseq
    %v145 = vshrl.u32 %v144, 7
    %v146 = vsub.s32 0, %v145
    %v147 = vrot.slane %v142, %v146
    %v153 = vunpack.c.l.b16 %v138
    %v154 = vunpack.c.l.b16 %v139
    %v155 = vunpack.c.l.b16 %v140
    %v156 = vunpack.c.l.b16 %v141
    %v157 = vpack.c.b16 %v154, %v153
    %v158 = vpack.c.b16 %v156, %v155
    %v162 = vsel %vm92, %v137, 0
    %164 = vmatprep.subr.bf16.mxu0 0
    %165 = vmatpush1.bf16.msra.mxu0 %v157
    %166 = vmatprep.subr.bf16.mxu0 0
    %167 = vmatpush1.bf16.msra.mxu0 %v158
    %168 = vmatprep.subr.bf16.mxu0 0
    %169 = vmatpush1.bf16.msra.mxu0 0
    %170 = vmatprep.subr.bf16.mxu0 0
    %171 = vmatpush1.bf16.msra.mxu0 0
    %172 = vmatprep.subr.bf16.mxu0 0
    %173 = vmatpush1.bf16.msra.mxu0 0
    %174 = vmatprep.subr.bf16.mxu0 0
    %175 = vmatpush1.bf16.msra.mxu0 0
    %176 = vmatprep.subr.bf16.mxu0 0
    %177 = vmatpush1.bf16.msra.mxu0 0
    %178 = vmatprep.subr.bf16.mxu0 0
    %179 = vmatpush1.bf16.msra.mxu0 0
    %180 = vmatprep.subr.bf16.mxu0 0
    %181 = vmatpush1.bf16.msra.mxu0 0
    %182 = vmatprep.subr.bf16.mxu0 0
    %183 = vmatpush1.bf16.msra.mxu0 0
    %184 = vmatprep.subr.bf16.mxu0 0
    %185 = vmatpush1.bf16.msra.mxu0 0
    %186 = vmatprep.subr.bf16.mxu0 0
    %187 = vmatpush1.bf16.msra.mxu0 0
    %188 = vmatprep.subr.bf16.mxu0 0
    %189 = vmatpush1.bf16.msra.mxu0 0
    %190 = vmatprep.subr.bf16.mxu0 0
    %191 = vmatpush1.bf16.msra.mxu0 0
    %192 = vmatprep.subr.bf16.mxu0 0
    %193 = vmatpush1.bf16.msra.mxu0 0
    %194 = vmatprep.subr.bf16.mxu0 0
    %195 = vmatpush1.bf16.msra.mxu0 0
    %196 = vmatprep.mubr.bf16.mxu0 0
    %197 = vmatmul.mubr.bf16.gmra.mrb[0].mxu0 %v162
    %v198 = vpop.f32.mrb[0].mxu0
    %v199 = vadd.f32 %v147, %v198
    %v200 = vpop.f32.mrb[0].mxu0
    %v201 = vpop.f32.mrb[0].mxu0
    %v202 = vpop.f32.mrb[0].mxu0
    %203 = vdwg.mxu0
    %v204 = vtanh.pop %v199
    %v205 = vld [vmem:[%s5] sm:$0x1]
    %v207 = vlaneseq
    %v208 = vshrl.u32 %v207, 7
    %v209 = vsub.s32 0, %v208
    %v210 = vrot.slane %v205, %v209
    %v212 = vmul.f32 %v204, %v210
    %v213 = vsel %vm92, %v212, 0.0
    %214 = vadd.xlane.f32.xlu0 %v213
    %v215 = vpop.xlane.xlu0 %214
    %s216 = sld [smem:[#allocation2]]
    %v217 = vstv %s216
    %v218 = vadd.f32 %v215, %v217
    %vm219 = vcmask 7168
    %220 = vst.msk [vmem:[%s7] sm:$0xff] %vm219, %v218
    // Predicated region
    $region42: #{tpu_custom_call.1} parent=1 // pred_check
      _
    $region43: #{tpu_custom_call.1} parent=1 // pred_check_branch
      %222 = sbr.rel (0) target = $region45
    $region44: #{tpu_custom_call.1} parent=1 // pred_region
      _
    $region45: #{tpu_custom_call.1} parent=1 // pred_fallthru
      _
    // Predicated region
    $region46: #{tpu_custom_call.1} parent=1 // pred_check
      _
    $region47: #{tpu_custom_call.1} parent=1 // pred_check_branch
      %224 = sbr.rel (0) target = $region49
    $region48: #{tpu_custom_call.1} parent=1 // pred_region
      _
    $region49: #{tpu_custom_call.1} parent=1 // pred_fallthru
      _
    %225 = vsyncpa [#allocation4], 1
    %226 = vsyncpa [#allocation6], 1

</llo_original>
